<compile_context>
chip_gen: v5e
topology: v5e:2x2
jax: 0.10.0
libtpu: 0.0.40
codegen_flags: <defaults>
</compile_context>

<pallas_src>
import jax
import jax.numpy as jnp
from jax.experimental import pallas as pl
from jax.experimental.pallas import tpu as pltpu

LANE = 128
VMEM_LIMIT = 32 * 1024 * 1024   # well under v7x's 64 MiB physical VMEM


def _round_up(x, m):
    return ((x + m - 1) // m) * m


# --------------------------- kernel 1: XW = H @ W -------------------------- #
def _xw_kernel(h_ref, w_ref, o_ref):
    o_ref[...] = jnp.dot(h_ref[...], w_ref[...],
                         preferred_element_type=jnp.float32).astype(o_ref.dtype)


def _xw(h, w, tm):
    n, f = h.shape
    hp = w.shape[1]
    return pl.pallas_call(
        _xw_kernel,
        out_shape=jax.ShapeDtypeStruct((n, hp), jnp.bfloat16),
        grid=(n // tm,),
        in_specs=[pl.BlockSpec((tm, f), lambda i: (i, 0)),
                  pl.BlockSpec((f, hp), lambda i: (0, 0))],
        out_specs=pl.BlockSpec((tm, hp), lambda i: (i, 0)),
        compiler_params=pltpu.CompilerParams(
            dimension_semantics=("parallel",),
            vmem_limit_bytes=VMEM_LIMIT),
    )(h, w)


# --------------- kernel 2: ReLU(A_hat @ XW + b), tiled reduction ------------ #
def _gcn_agg_kernel(mask_ref, a_ref, xw_ref, b_ref, o_ref, acc_ref):
    i = pl.program_id(0)
    k = pl.program_id(1)

    @pl.when(k == 0)
    def _():
        acc_ref[...] = jnp.zeros_like(acc_ref)

    # Skip MXU work on all-zero adjacency tiles (block-diagonal batched graphs).
    # TODO(synk): to also skip the A-tile DMA, remap the reduction range per
    # row block via data-dependent index_maps instead of a compute mask.
    @pl.when(mask_ref[i, k] != 0)
    def _():
        acc_ref[...] += jnp.dot(a_ref[...], xw_ref[...],
                                preferred_element_type=jnp.float32)

    @pl.when(k == pl.num_programs(1) - 1)
    def _():
        # GCNConv adds bias after aggregation; ReLU follows; dropout = identity.
        o_ref[...] = jnp.maximum(acc_ref[...] + b_ref[...], 0.0).astype(o_ref.dtype)


def _gcn_agg(mask, a, xw, b, tm, tk):
    n = a.shape[0]
    hp = xw.shape[1]
    return pl.pallas_call(
        _gcn_agg_kernel,
        out_shape=jax.ShapeDtypeStruct((n, hp), jnp.bfloat16),
        grid_spec=pltpu.PrefetchScalarGridSpec(
            num_scalar_prefetch=1,
            grid=(n // tm, n // tk),
            in_specs=[pl.BlockSpec((tm, tk), lambda i, k, m: (i, k)),
                      pl.BlockSpec((tk, hp), lambda i, k, m: (k, 0)),
                      pl.BlockSpec((1, hp), lambda i, k, m: (0, 0))],
            out_specs=pl.BlockSpec((tm, hp), lambda i, k, m: (i, 0)),
            scratch_shapes=[pltpu.VMEM((tm, hp), jnp.float32)]),
        compiler_params=pltpu.CompilerParams(
            dimension_semantics=("parallel", "arbitrary"),
            vmem_limit_bytes=VMEM_LIMIT),
    )(mask, a, xw, b)


# -------------- kernel 3: mean-pool (P @ H) + MLP classifier --------------- #
def _pool_cls_kernel(p_ref, h_ref, wc1_ref, bc1_ref, wc2_ref, bc2_ref,
                     o_ref, acc_ref):
    k = pl.program_id(0)

    @pl.when(k == 0)
    def _():
        acc_ref[...] = jnp.zeros_like(acc_ref)

    acc_ref[...] += jnp.dot(p_ref[...], h_ref[...],
                            preferred_element_type=jnp.float32)

    @pl.when(k == pl.num_programs(0) - 1)
    def _():
        g = acc_ref[...].astype(jnp.bfloat16)
        z = jnp.dot(g, wc1_ref[...],
                    preferred_element_type=jnp.float32) + bc1_ref[...]
        z = jnp.maximum(z, 0.0)   # Dropout after ReLU is identity (eval mode)
        o_ref[...] = (jnp.dot(z.astype(jnp.bfloat16), wc2_ref[...],
                              preferred_element_type=jnp.float32) + bc2_ref[...])


def _pool_cls(p, h, wc1, bc1, wc2, bc2, tk):
    g_rows, n = p.shape
    hp = h.shape[1]
    h2p = wc1.shape[1]
    cp = wc2.shape[1]
    return pl.pallas_call(
        _pool_cls_kernel,
        out_shape=jax.ShapeDtypeStruct((g_rows, cp), jnp.float32),
        grid=(n // tk,),
        in_specs=[pl.BlockSpec((g_rows, tk), lambda k: (0, k)),
                  pl.BlockSpec((tk, hp), lambda k: (k, 0)),
                  pl.BlockSpec((hp, h2p), lambda k: (0, 0)),
                  pl.BlockSpec((1, h2p), lambda k: (0, 0)),
                  pl.BlockSpec((h2p, cp), lambda k: (0, 0)),
                  pl.BlockSpec((1, cp), lambda k: (0, 0))],
        out_specs=pl.BlockSpec((g_rows, cp), lambda k: (0, 0)),
        scratch_shapes=[pltpu.VMEM((g_rows, hp), jnp.float32)],
        compiler_params=pltpu.CompilerParams(
            dimension_semantics=("arbitrary",),
            vmem_limit_bytes=VMEM_LIMIT),
    )(p, h, wc1, bc1, wc2, bc2)


# ------------------------------ JAX wrapper -------------------------------- #
def gnn_forward(a_hat, x, pool, params):
    (w1, b1, w2, b2, w3, b3, wc1, bc1, wc2, bc2) = params
    n, f_in = x.shape
    c = wc2.shape[1]
    hidden = w1.shape[1]
    h2 = wc1.shape[1]

    # 256-aligned tiles for v6e/v7x's 2x256^2 MXU when the graph is big enough,
    # 128 otherwise (matches v5e's 4x128^2 MXU and keeps padding small).
    blk = 256 if n >= 256 else 128
    tm = tk = blk

    n_pad = _round_up(n, blk)
    f_pad = _round_up(f_in, LANE)
    h_pad = _round_up(hidden, LANE)
    h2_pad = _round_up(h2, LANE)
    c_pad = _round_up(c, LANE)

    bf16 = jnp.bfloat16
    a_f32 = jnp.pad(a_hat.astype(jnp.float32),
                    ((0, n_pad - n), (0, n_pad - n)))
    a_p = a_f32.astype(bf16)
    x_p = jnp.pad(x.astype(jnp.float32),
                  ((0, n_pad - n), (0, f_pad - f_in))).astype(bf16)
    p_p = jnp.pad(pool.astype(jnp.float32),
                  ((0, 0), (0, n_pad - n))).astype(bf16)

    def pad_w(w, rp, cp_):
        return jnp.pad(w.astype(jnp.float32),
                       ((0, rp - w.shape[0]), (0, cp_ - w.shape[1]))).astype(bf16)

    def pad_b(b, cp_):
        return jnp.pad(b.astype(jnp.float32), ((0, 0), (0, cp_ - b.shape[1])))

    layer_params = [
        (pad_w(w1, f_pad, h_pad), pad_b(b1, h_pad)),
        (pad_w(w2, h_pad, h_pad), pad_b(b2, h_pad)),
        (pad_w(w3, h_pad, h_pad), pad_b(b3, h_pad)),
    ]
    wc1p, bc1p = pad_w(wc1, h_pad, h2_pad), pad_b(bc1, h2_pad)
    wc2p, bc2p = pad_w(wc2, h2_pad, c_pad), pad_b(bc2, c_pad)

    n_i, n_k = n_pad // tm, n_pad // tk
    # Per-tile nonzero mask of the (block-diagonal) batched adjacency.
    mask = (a_f32.reshape(n_i, tm, n_k, tk) != 0.0).any(axis=(1, 3)).astype(jnp.int32)

    h = x_p
    for (wp, bp) in layer_params:
        xw = _xw(h, wp, tm)                       # (n_pad, h_pad) bf16
        h = _gcn_agg(mask, a_p, xw, bp, tm, tk)   # (n_pad, h_pad) bf16

    out = _pool_cls(p_p, h, wc1p, bc1p, wc2p, bc2p, tk)
    return out[:, :c]


# ------------------------------- glue helpers ------------------------------ #
def build_norm_adj(edge_index, num_nodes):
    """Dense GCN-normalized adjacency: D^{-1/2} (A + I) D^{-1/2}."""
    src, dst = edge_index[0], edge_index[1]
    A = jnp.zeros((num_nodes, num_nodes), jnp.float32)
    A = A.at[dst, src].set(1.0)          # message flows src -> dst
    A = A + jnp.eye(num_nodes, dtype=jnp.float32)
    deg = A.sum(axis=1)
    dinv = jax.lax.rsqrt(jnp.maximum(deg, 1.0))
    return A * dinv[:, None] * dinv[None, :]


def build_pool_matrix(batch, num_graphs):
    """Row-stochastic pooling matrix: P[g, i] = 1/|graph g| if batch[i] == g."""
    onehot = (batch[None, :] == jnp.arange(num_graphs)[:, None]).astype(jnp.float32)
    counts = onehot.sum(axis=1, keepdims=True)
    return onehot / jnp.maximum(counts, 1.0)


def init_params(key, num_features, num_classes, hidden):
    ks = jax.random.split(key, 10)

    def lin(k, fan_in, fan_out):
        scale = 1.0 / jnp.sqrt(jnp.float32(fan_in))
        w = jax.random.uniform(k, (fan_in, fan_out), jnp.float32, -scale, scale)
        b = jnp.zeros((1, fan_out), jnp.float32)
        return w, b

    w1, b1 = lin(ks[0], num_features, hidden)
    w2, b2 = lin(ks[1], hidden, hidden)
    w3, b3 = lin(ks[2], hidden, hidden)
    wc1, bc1 = lin(ks[3], hidden, hidden // 2)
    wc2, bc2 = lin(ks[4], hidden // 2, num_classes)
    return (w1, b1, w2, b2, w3, b3, wc1, bc1, wc2, bc2)


# ---------------------------------- main ----------------------------------- #
if __name__ == "__main__":
    key = jax.random.PRNGKey(0)
    k_x, k_p = jax.random.split(key)

    num_nodes = 16        # 2 graphs x 8 nodes
    num_features = 8
    hidden = 32
    num_classes = 4
    num_graphs = 2

    # node features
    x = jax.random.normal(k_x, (num_nodes, num_features), jnp.float32)

    # deterministic edge_index: a ring inside each graph (both directions)
    src_list, dst_list = [], []
    for g in range(num_graphs):
        base = g * 8
        for i in range(8):
            a, b = base + i, base + (i + 1) % 8
            src_list += [a, b]
            dst_list += [b, a]
    edge_index = jnp.array([src_list, dst_list], dtype=jnp.int32)

    # graph assignment vector
    batch = jnp.concatenate([jnp.zeros(8, jnp.int32), jnp.ones(8, jnp.int32)])

    # glue: dense normalized adjacency + mean-pool matrix
    a_hat = build_norm_adj(edge_index, num_nodes)
    pool = build_pool_matrix(batch, num_graphs)

    # deterministic parameters
    params = init_params(k_p, num_features, num_classes, hidden)

    out = gnn_forward(a_hat, x, pool, params)
    jax.block_until_ready(out)
    assert out.shape == (num_graphs, num_classes)
    # TODO(synk): dropout implemented as identity (eval mode); training-mode RNG
    # dropout would use pltpu.prng_seed / prng_random_bits.
    print("KERNEL_OK")
</pallas_src>

<mosaic_0001>
module attributes {stable_mosaic.version = 11 : i64} {
  func.func @_xw_kernel(%arg0: i32, %arg1: memref<128x128xbf16, #tpu.memory_space<vmem>>, %arg2: memref<128x128xbf16, #tpu.memory_space<vmem>>, %arg3: memref<128x128xbf16, #tpu.memory_space<vmem>>) attributes {dimension_semantics = [#tpu.dimension_semantics<parallel>], iteration_bounds = array<i64: 1>, scalar_prefetch = 0 : i64, scratch_operands = 0 : i64, tpu.core_type = #tpu.core_type<tc>, window_params = [{transform_indices = @transform_0, window_bounds = array<i64: 128, 128>}, {pipeline_mode = #tpu.pipeline_mode<synchronous>, transform_indices = @transform_1, window_bounds = array<i64: 128, 128>}, {transform_indices = @transform_2, window_bounds = array<i64: 128, 128>}]} {
    %c0 = arith.constant 0 : index
    %c0_0 = arith.constant 0 : index
    %0 = vector.load %arg1[%c0, %c0_0] : memref<128x128xbf16, #tpu.memory_space<vmem>>, vector<128x128xbf16>
    %c0_1 = arith.constant 0 : index
    %c0_2 = arith.constant 0 : index
    %1 = vector.load %arg2[%c0_1, %c0_2] : memref<128x128xbf16, #tpu.memory_space<vmem>>, vector<128x128xbf16>
    %cst = arith.constant dense<0.000000e+00> : vector<128x128xf32>
    %2 = tpu.matmul %0, %1, %cst {dimension_numbers = #tpu.dot_dimension_numbers<[1], [0], [0], [1], [0, 0, 1, 1], [], []>} : vector<128x128xbf16>, vector<128x128xbf16>, vector<128x128xf32> -> vector<128x128xf32>
    %3 = arith.truncf %2 : vector<128x128xf32> to vector<128x128xbf16>
    %c0_3 = arith.constant 0 : index
    %c0_4 = arith.constant 0 : index
    %4 = vector.load %arg3[%c0_3, %c0_4] : memref<128x128xbf16, #tpu.memory_space<vmem>>, vector<128x128xbf16>
    tpu.vector_store %arg3[%c0_3, %c0_4], %3 {strides = array<i32>} : memref<128x128xbf16, #tpu.memory_space<vmem>>, vector<128x128xbf16>,
    return
  }
  func.func @transform_0(%arg0: i32) -> (i32, i32) {
    %c0_i32 = arith.constant 0 : i32
    %c0_i32_0 = arith.constant 0 : i32
    return %arg0, %c0_i32 : i32, i32
  }
  func.func @transform_1(%arg0: i32) -> (i32, i32) {
    %c0_i32 = arith.constant 0 : i32
    %c0_i32_0 = arith.constant 0 : i32
    %c0_i32_1 = arith.constant 0 : i32
    return %c0_i32, %c0_i32_0 : i32, i32
  }
  func.func @transform_2(%arg0: i32) -> (i32, i32) {
    %c0_i32 = arith.constant 0 : i32
    %c0_i32_0 = arith.constant 0 : i32
    return %arg0, %c0_i32 : i32, i32
  }
}

</mosaic_0001>

<llo_original>
// kernel: tpu_custom_call.1
$region0: #{tpu_custom_call.1}
  #allocation0 [shape = 'u32[]', space=smem, size = 0x4, offset = 0x4, fixed_abs, tag = 'smem constant byte address 0x4 - core index']
  #allocation1 [shape = 'u32[72,128]{1,0:T(1,128)}', space=vmem, size = 0x9000, scoped, tag = 'internal scratch']
  %s0 = inlined_call_operand.hbm [shape: bf16[128,128], index: 0, kind: input, shape index: {}]
  %s1 = inlined_call_operand.hbm [shape: bf16[128,128], index: 1, kind: input, shape index: {}]
  %s2 = inlined_call_operand.hbm [shape: bf16[128,128], index: 2, kind: output, shape index: {}]
  %s3 = sld [smem:[#allocation0]]
  $region26: #{tpu_custom_call.1} parent=0
    _
  %s5 = ssub.s32 1, %s3
  %s6 = scalar_select 0, %s5, %s3
  $region1: #{tpu_custom_call.1} parent=0
    #allocation2 [shape = 'u8[32768]{0}', space=vmem, size = 0x8000, scoped, tag = 'input window, operand 0, single buffered']
    #allocation3 [shape = 's32[1]{0}', space=sflag, size = 0x4, scoped, tag = 'scoped memory for tpu_custom_call.1']
    #allocation4 [shape = 's32[1]{0}', space=sflag, size = 0x4, scoped, tag = 'scoped memory for tpu_custom_call.1']
    #allocation5 [shape = 'u8[32768]{0}', space=vmem, size = 0x8000, scoped, tag = 'input window, operand 1, single buffered']
    #allocation6 [shape = 's32[1]{0}', space=sflag, size = 0x4, scoped, tag = 'scoped memory for tpu_custom_call.1']
    #allocation7 [shape = 'u8[32768]{0}', space=vmem, size = 0x8000, scoped, tag = 'output window, operand 0, single buffered']
    %7 = vsyncpa [#allocation3], 0
    %8 = vsyncpa [#allocation6], 0
    %9 = vsyncpa [#allocation4], 0
    // Predicated region
    $region2: #{tpu_custom_call.1} parent=1 // pred_check
      _
    $region3: #{tpu_custom_call.1} parent=1 // pred_check_branch
      %11 = sbr.rel (0) target = $region5
    $region4: #{tpu_custom_call.1} parent=1 // pred_region
      %13 = vsyncadd [#allocation3], 0
      %s14 = sshll.u32 %s0, 4
      %s15 = int_to_ptr.hbm [resolvable:$true] %s14
      %s16 = sshll.u32 [#allocation2], 4
      %s17 = int_to_ptr.vmem [resolvable:$true] %s16
      %22 = dma.hbm_to_vmem [thread:$0]  %s15, 1024, %s17, [#allocation3], 64, 64, 4
    $region5: #{tpu_custom_call.1} parent=1 // pred_fallthru
      _
    // Predicated region
    $region6: #{tpu_custom_call.1} parent=1 // pred_check
      _
    $region7: #{tpu_custom_call.1} parent=1 // pred_check_branch
      %24 = sbr.rel (0) target = $region9
    $region8: #{tpu_custom_call.1} parent=1 // pred_region
      %26 = vsyncadd [#allocation6], 0
      %s27 = sshll.u32 %s1, 4
      %s28 = int_to_ptr.hbm [resolvable:$true] %s27
      %s29 = sshll.u32 [#allocation5], 4
      %s30 = int_to_ptr.vmem [resolvable:$true] %s29
      %35 = dma.hbm_to_vmem [thread:$0]  %s28, 1024, %s30, [#allocation6], 64, 64, 4
    $region9: #{tpu_custom_call.1} parent=1 // pred_fallthru
      _
    // Predicated region
    $region10: #{tpu_custom_call.1} parent=1 // pred_check
      _
    $region11: #{tpu_custom_call.1} parent=1 // pred_check_branch
      %37 = sbr.rel (0) target = $region13
    $region12: #{tpu_custom_call.1} parent=1 // pred_region
      %39 = dma.done [#allocation3], 1024
    $region13: #{tpu_custom_call.1} parent=1 // pred_fallthru
      _
    // Predicated region
    $region14: #{tpu_custom_call.1} parent=1 // pred_check
      _
    $region15: #{tpu_custom_call.1} parent=1 // pred_check_branch
      %41 = sbr.rel (0) target = $region17
    $region16: #{tpu_custom_call.1} parent=1 // pred_region
      %43 = dma.done [#allocation6], 1024
    $region17: #{tpu_custom_call.1} parent=1 // pred_fallthru
      _
    %v44 = vld [vmem:[#allocation2] sm:$0xf]
    %v45 = vld [vmem:[#allocation2 + $0x4] sm:$0xf]
    %v46 = vld [vmem:[#allocation2 + $0x8] sm:$0xf]
    %v47 = vld [vmem:[#allocation2 + $0xc] sm:$0xf]
    %v48 = vld [vmem:[#allocation2 + $0x10] sm:$0xf]
    %v49 = vld [vmem:[#allocation2 + $0x14] sm:$0xf]
    %v50 = vld [vmem:[#allocation2 + $0x18] sm:$0xf]
    %v51 = vld [vmem:[#allocation2 + $0x1c] sm:$0xf]
    %v52 = vld [vmem:[#allocation2 + $0x20] sm:$0xf]
    %v53 = vld [vmem:[#allocation2 + $0x24] sm:$0xf]
    %v54 = vld [vmem:[#allocation2 + $0x28] sm:$0xf]
    %v55 = vld [vmem:[#allocation2 + $0x2c] sm:$0xf]
    %v56 = vld [vmem:[#allocation2 + $0x30] sm:$0xf]
    %v57 = vld [vmem:[#allocation2 + $0x34] sm:$0xf]
    %v58 = vld [vmem:[#allocation2 + $0x38] sm:$0xf]
    %v59 = vld [vmem:[#allocation2 + $0x3c] sm:$0xf]
    %v60 = vld [vmem:[#allocation5] sm:$0xf]
    %v61 = vld [vmem:[#allocation5 + $0x4] sm:$0xf]
    %v62 = vld [vmem:[#allocation5 + $0x8] sm:$0xf]
    %v63 = vld [vmem:[#allocation5 + $0xc] sm:$0xf]
    %v64 = vld [vmem:[#allocation5 + $0x10] sm:$0xf]
    %v65 = vld [vmem:[#allocation5 + $0x14] sm:$0xf]
    %v66 = vld [vmem:[#allocation5 + $0x18] sm:$0xf]
    %v67 = vld [vmem:[#allocation5 + $0x1c] sm:$0xf]
    %v68 = vld [vmem:[#allocation5 + $0x20] sm:$0xf]
    %v69 = vld [vmem:[#allocation5 + $0x24] sm:$0xf]
    %v70 = vld [vmem:[#allocation5 + $0x28] sm:$0xf]
    %v71 = vld [vmem:[#allocation5 + $0x2c] sm:$0xf]
    %v72 = vld [vmem:[#allocation5 + $0x30] sm:$0xf]
    %v73 = vld [vmem:[#allocation5 + $0x34] sm:$0xf]
    %v74 = vld [vmem:[#allocation5 + $0x38] sm:$0xf]
    %v75 = vld [vmem:[#allocation5 + $0x3c] sm:$0xf]
    %v92 = vunpack.c.l.b16 %v44
    %v93 = vunpack.c.l.b16 %v45
    %v94 = vunpack.c.l.b16 %v46
    %v95 = vunpack.c.l.b16 %v47
    %v96 = vunpack.c.l.b16 %v48
    %v97 = vunpack.c.l.b16 %v49
    %v98 = vunpack.c.l.b16 %v50
    %v99 = vunpack.c.l.b16 %v51
    %v100 = vunpack.c.l.b16 %v52
    %v101 = vunpack.c.l.b16 %v53
    %v102 = vunpack.c.l.b16 %v54
    %v103 = vunpack.c.l.b16 %v55
    %v104 = vunpack.c.l.b16 %v56
    %v105 = vunpack.c.l.b16 %v57
    %v106 = vunpack.c.l.b16 %v58
    %v107 = vunpack.c.l.b16 %v59
    %v108 = vpack.c.b16 %v93, %v92
    %v109 = vpack.c.b16 %v95, %v94
    %v110 = vpack.c.b16 %v97, %v96
    %v111 = vpack.c.b16 %v99, %v98
    %v112 = vpack.c.b16 %v101, %v100
    %v113 = vpack.c.b16 %v103, %v102
    %v114 = vpack.c.b16 %v105, %v104
    %v115 = vpack.c.b16 %v107, %v106
    %v140 = vunpack.c.l.b16 %v60
    %v141 = vunpack.c.l.b16 %v61
    %v142 = vunpack.c.l.b16 %v62
    %v143 = vunpack.c.l.b16 %v63
    %v144 = vunpack.c.l.b16 %v64
    %v145 = vunpack.c.l.b16 %v65
    %v146 = vunpack.c.l.b16 %v66
    %v147 = vunpack.c.l.b16 %v67
    %v148 = vunpack.c.l.b16 %v68
    %v149 = vunpack.c.l.b16 %v69
    %v150 = vunpack.c.l.b16 %v70
    %v151 = vunpack.c.l.b16 %v71
    %v152 = vunpack.c.l.b16 %v72
    %v153 = vunpack.c.l.b16 %v73
    %v154 = vunpack.c.l.b16 %v74
    %v155 = vunpack.c.l.b16 %v75
    %v156 = vpack.c.b16 %v141, %v140
    %v157 = vpack.c.b16 %v143, %v142
    %v158 = vpack.c.b16 %v145, %v144
    %v159 = vpack.c.b16 %v147, %v146
    %v160 = vpack.c.b16 %v149, %v148
    %v161 = vpack.c.b16 %v151, %v150
    %v162 = vpack.c.b16 %v153, %v152
    %v163 = vpack.c.b16 %v155, %v154
    %172 = vmatpush.bf16.msra.mxu0 %v163
    %173 = vmatpush.bf16.msra.mxu0 %v162
    %174 = vmatpush.bf16.msra.mxu0 %v161
    %175 = vmatpush.bf16.msra.mxu0 %v160
    %176 = vmatpush.bf16.msra.mxu0 %v159
    %177 = vmatpush.bf16.msra.mxu0 %v158
    %178 = vmatpush.bf16.msra.mxu0 %v157
    %179 = vmatpush.bf16.msra.mxu0 %v156
    %180 = vmatmul.bf16.gmra.mxu0 %v108
    %v181 = vpop.f32.mrf.mxu0
    %v182 = vadd.f32 0.0, %v181
    %v183 = vpop.f32.mrf.mxu0
    %v184 = vadd.f32 0.0, %v183
    %185 = vmatmul.bf16.gmra.mxu0 %v109
    %v186 = vpop.f32.mrf.mxu0
    %v187 = vadd.f32 0.0, %v186
    %v188 = vpop.f32.mrf.mxu0
    %v189 = vadd.f32 0.0, %v188
    %190 = vmatmul.bf16.gmra.mxu0 %v110
    %v191 = vpop.f32.mrf.mxu0
    %v192 = vadd.f32 0.0, %v191
    %v193 = vpop.f32.mrf.mxu0
    %v194 = vadd.f32 0.0, %v193
    %195 = vmatmul.bf16.gmra.mxu0 %v111
    %v196 = vpop.f32.mrf.mxu0
    %v197 = vadd.f32 0.0, %v196
    %v198 = vpop.f32.mrf.mxu0
    %v199 = vadd.f32 0.0, %v198
    %200 = vmatmul.bf16.gmra.mxu0 %v112
    %v201 = vpop.f32.mrf.mxu0
    %v202 = vadd.f32 0.0, %v201
    %v203 = vpop.f32.mrf.mxu0
    %v204 = vadd.f32 0.0, %v203
    %205 = vmatmul.bf16.gmra.mxu0 %v113
    %v206 = vpop.f32.mrf.mxu0
    %v207 = vadd.f32 0.0, %v206
    %v208 = vpop.f32.mrf.mxu0
    %v209 = vadd.f32 0.0, %v208
    %210 = vmatmul.bf16.gmra.mxu0 %v114
    %v211 = vpop.f32.mrf.mxu0
    %v212 = vadd.f32 0.0, %v211
    %v213 = vpop.f32.mrf.mxu0
    %v214 = vadd.f32 0.0, %v213
    %215 = vmatmul.bf16.gmra.mxu0 %v115
    %v216 = vpop.f32.mrf.mxu0
    %v217 = vadd.f32 0.0, %v216
    %v218 = vpop.f32.mrf.mxu0
    %v219 = vadd.f32 0.0, %v218
    %220 = vdwg.mxu0
    %v221 = vpack.c.bf16 %v182, %v182
    %v222 = vpack.c.bf16 %v184, %v184
    %v223 = vpack.c.bf16 %v187, %v187
    %v224 = vpack.c.bf16 %v189, %v189
    %v225 = vpack.c.bf16 %v192, %v192
    %v226 = vpack.c.bf16 %v194, %v194
    %v227 = vpack.c.bf16 %v197, %v197
    %v228 = vpack.c.bf16 %v199, %v199
    %v229 = vpack.c.bf16 %v202, %v202
    %v230 = vpack.c.bf16 %v204, %v204
    %v231 = vpack.c.bf16 %v207, %v207
    %v232 = vpack.c.bf16 %v209, %v209
    %v233 = vpack.c.bf16 %v212, %v212
    %v234 = vpack.c.bf16 %v214, %v214
    %v235 = vpack.c.bf16 %v217, %v217
    %v236 = vpack.c.bf16 %v219, %v219
    %237 = vst [vmem:[#allocation7] sm:$0xf] %v221
    %238 = vst [vmem:[#allocation7 + $0x4] sm:$0xf] %v222
    %239 = vst [vmem:[#allocation7 + $0x8] sm:$0xf] %v223
    %240 = vst [vmem:[#allocation7 + $0xc] sm:$0xf] %v224
    %241 = vst [vmem:[#allocation7 + $0x10] sm:$0xf] %v225
    %242 = vst [vmem:[#allocation7 + $0x14] sm:$0xf] %v226
    %243 = vst [vmem:[#allocation7 + $0x18] sm:$0xf] %v227
    %244 = vst [vmem:[#allocation7 + $0x1c] sm:$0xf] %v228
    %245 = vst [vmem:[#allocation7 + $0x20] sm:$0xf] %v229
    %246 = vst [vmem:[#allocation7 + $0x24] sm:$0xf] %v230
    %247 = vst [vmem:[#allocation7 + $0x28] sm:$0xf] %v231
    %248 = vst [vmem:[#allocation7 + $0x2c] sm:$0xf] %v232
    %249 = vst [vmem:[#allocation7 + $0x30] sm:$0xf] %v233
    %250 = vst [vmem:[#allocation7 + $0x34] sm:$0xf] %v234
    %251 = vst [vmem:[#allocation7 + $0x38] sm:$0xf] %v235
    %252 = vst [vmem:[#allocation7 + $0x3c] sm:$0xf] %v236
    // Predicated region
    $region18: #{tpu_custom_call.1} parent=1 // pred_check
      _
    $region19: #{tpu_custom_call.1} parent=1 // pred_check_branch
      %254 = sbr.rel (0) target = $region21
    $region20: #{tpu_custom_call.1} parent=1 // pred_region
      %256 = vsyncadd [#allocation4], 0
      %s257 = sshll.u32 [#allocation7], 4
      %s258 = int_to_ptr.vmem [resolvable:$true] %s257
      %s259 = sshll.u32 %s2, 4
      %s260 = int_to_ptr.hbm [resolvable:$true] %s259
      %265 = dma.vmem_to_hbm [thread:$0]  %s258, 1024, %s260, [#allocation4], 64, 64, 4
    $region21: #{tpu_custom_call.1} parent=1 // pred_fallthru
      _
    // Predicated region
    $region22: #{tpu_custom_call.1} parent=1 // pred_check
      _
    $region23: #{tpu_custom_call.1} parent=1 // pred_check_branch
      %267 = sbr.rel (0) target = $region25
    $region24: #{tpu_custom_call.1} parent=1 // pred_region
      %269 = dma.done [#allocation4], 1024
    $region25: #{tpu_custom_call.1} parent=1 // pred_fallthru
      _
    %270 = vsyncpa [#allocation3], 1
    %271 = vsyncpa [#allocation6], 1
    %272 = vsyncpa [#allocation4], 1

</llo_original>
